<compile_context>
chip_gen: v6e
topology: v6e:2x2x1
jax: 0.10.0
libtpu: 0.0.40
codegen_flags: <defaults>
</compile_context>

<pallas_src>
import functools

import jax
import jax.numpy as jnp
from jax import lax
from jax.experimental import pallas as pl
from jax.experimental.pallas import tpu as pltpu

# AsymmetricUnifiedFocalLoss defaults (passed to both sub-losses).
WEIGHT = 0.5
DELTA = 0.6
GAMMA = 0.2
EPS = 1e-7

_SUB = 8                            # sublane rows per (batch, class) slab
_LANE = 128                         # vreg lane width
_MAX_CHUNKS = 512                   # 128-lane chunks per block -> 2 MiB f32 input block
_MAX_FULLDIM_BYTES = 4 * 1024 * 1024  # budget for a single full-extent lane block (f32)


def _contribs(yp0, yp1, yt0, yt1, mask, delta, gamma, eps):
    """Per-element contributions for one (8, cw) chunk.

    Returns 7 (8, cw) f32 arrays: (tp0, syt0, syp0, tp1, syt1, syp1, focal_ce).
    `mask` (or None) zeroes lanes already covered by a previous chunk.
    """
    yp0 = jnp.clip(yp0, eps, 1.0 - eps)
    yp1 = jnp.clip(yp1, eps, 1.0 - eps)
    if mask is not None:
        yt0 = jnp.where(mask, yt0, 0.0)
        yt1 = jnp.where(mask, yt1, 0.0)
        syp0 = jnp.where(mask, yp0, 0.0)
        syp1 = jnp.where(mask, yp1, 0.0)
    else:
        syp0, syp1 = yp0, yp1
    tp0 = yt0 * yp0
    tp1 = yt1 * yp1
    # Asymmetric focal CE: pow(1-p, gamma) applied to the background class only.
    w0 = jnp.exp(gamma * jnp.log(1.0 - yp0))          # pow(1 - yp0, gamma), base >= eps
    ce0 = yt0 * jnp.log(yp0)
    ce1 = yt1 * jnp.log(yp1)
    fl = -((1.0 - delta) * (w0 * ce0) + delta * ce1)
    return (tp0, yt0, syp0, tp1, yt1, syp1, fl)


def _aufl_kernel(yp0_ref, yp1_ref, yt0_ref, yt1_ref, out_ref, *, delta, gamma, eps):
    """Accumulate streaming per-(batch, class) sums over one (8, T) lane block.

    yp*/yt* refs: (8, T) class-0 / class-1 tiles of one batch.
    out_ref: (1, 7, 8, cw) f32 — doubles as the accumulator across lane grid steps.
    """
    s = pl.program_id(1)
    rows, T = yp0_ref.shape
    cw = out_ref.shape[3]
    n_full = T // cw
    rem = T - n_full * cw                 # ragged lane tail within the block

    @pl.when(s == 0)
    def _init():
        out_ref[...] = jnp.zeros_like(out_ref)

    def load(off):
        return (yp0_ref[:, pl.ds(off, cw)].astype(jnp.float32),
                yp1_ref[:, pl.ds(off, cw)].astype(jnp.float32),
                yt0_ref[:, pl.ds(off, cw)].astype(jnp.float32),
                yt1_ref[:, pl.ds(off, cw)].astype(jnp.float32))

    def add(carry, contrib):
        return tuple(a + c for a, c in zip(carry, contrib))

    # Carried in vregs across the chunk loop; VMEM (output block) touched once per step.
    carry = tuple(out_ref[0, q] for q in range(7))

    if n_full <= 16:
        for i in range(n_full):
            carry = add(carry, _contribs(*load(i * cw), None, delta, gamma, eps))
    else:
        def body(i, c):
            off = pl.multiple_of(i * cw, cw)
            return add(c, _contribs(*load(off), None, delta, gamma, eps))
        carry = lax.fori_loop(0, n_full, body, carry, unroll=2)

    if rem:
        # Overlapped final chunk: re-read the last `cw` lanes and mask out the lanes
        # already covered by the previous chunk -> exact zero contribution, no HBM pad.
        mask = lax.broadcasted_iota(jnp.int32, (rows, cw), 1) >= (cw - rem)
        carry = add(carry, _contribs(*load(T - cw), mask, delta, gamma, eps))

    for q in range(7):
        out_ref[0, q] = carry[q]


def _largest_divisor_leq(n, cap):
    cap = max(1, min(cap, n))
    for d in range(cap, 0, -1):
        if n % d == 0:
            return d
    return 1


def _pick_chunks(n):
    t = _largest_divisor_leq(n, _MAX_CHUNKS)
    if t == n and n > 1:
        alt = _largest_divisor_leq(n, n // 2)
        if 2 * alt >= t:          # prefer >=2 lane steps (pipelining) if it costs <2x block size
            t = alt
    return t


def _plan(hw):
    """Lane plan: returns (hw_p, T, S, cw) — padded flat spatial size, block lane width
    over hw_p//8 lanes, lane grid steps, chunk / output lane width."""
    if hw % _SUB == 0:
        hw8 = hw // _SUB
        if hw8 % _LANE == 0:                         # common case: exact tiling, no pad
            n = hw8 // _LANE
            t = _pick_chunks(n)
            return hw, t * _LANE, n // t, _LANE
        if hw8 * _SUB * 4 <= _MAX_FULLDIM_BYTES:     # ragged lanes: one full-extent block, no pad
            return hw, hw8, 1, min(_LANE, hw8)
    # Rare fallback (hw not a multiple of 8, or huge & 128-misaligned): minimal zero-pad copy.
    hw_p = pl.cdiv(hw, _SUB * _LANE) * (_SUB * _LANE)
    n = (hw_p // _SUB) // _LANE
    t = _pick_chunks(n)
    return hw_p, t * _LANE, n // t, _LANE


def asymmetric_unified_focal_loss(y_pred, y_true,
                                  weight=WEIGHT, delta=DELTA, gamma=GAMMA, eps=EPS):
    """y_pred, y_true: (B, 2, H, W) NCHW floats (y_true may be bf16). Returns scalar loss."""
    B, C, H, W = y_pred.shape
    assert C == 2, "binary segmentation loss: channel dim must be 2"
    hw = H * W
    hw_p, T, S, cw = _plan(hw)
    npad = hw_p - hw

    yp = y_pred.reshape(B, C, hw)
    yt = y_true.reshape(B, C, hw)
    if npad:
        yp = jnp.pad(yp, ((0, 0), (0, 0), (0, npad)))
        yt = jnp.pad(yt, ((0, 0), (0, 0), (0, npad)))
    hw8 = hw_p // _SUB
    # Free reshape: rows ordered (b, c, r<8); each (b, c) slab is 8 contiguous rows, so the
    # class split is purely a row-block choice in the BlockSpecs (no strided loads / masks).
    yp = yp.reshape(B * C * _SUB, hw8)
    yt = yt.reshape(B * C * _SUB, hw8)

    spec_c0 = pl.BlockSpec((_SUB, T), lambda b, s: (C * b, s))
    spec_c1 = pl.BlockSpec((_SUB, T), lambda b, s: (C * b + 1, s))

    kernel = functools.partial(_aufl_kernel, delta=delta, gamma=gamma, eps=eps)
    partials = pl.pallas_call(
        kernel,
        out_shape=jax.ShapeDtypeStruct((B, 7, _SUB, cw), jnp.float32),
        grid=(B, S),
        in_specs=[spec_c0, spec_c1, spec_c0, spec_c1],
        out_specs=pl.BlockSpec((1, 7, _SUB, cw), lambda b, s: (b, 0, 0, 0)),
        compiler_params=pltpu.CompilerParams(
            dimension_semantics=("parallel", "arbitrary"),
            vmem_limit_bytes=32 * 1024 * 1024),
    )(yp, yp, yt, yt)

    # Tiny O(B) finalization in plain JAX.
    sums = jnp.sum(partials, axis=(2, 3))             # (B, 7)
    tp0, syt0, syp0, tp1, syt1, syp1, fls = (sums[:, i] for i in range(7))

    if npad:
        # Zero-padded tail (fallback path only): yt==0 contributes nothing except
        # clip(0)=eps to sum(yp).
        syp0 = syp0 - npad * eps
        syp1 = syp1 - npad * eps

    fn0, fp0 = syt0 - tp0, syp0 - tp0
    fn1, fp1 = syt1 - tp1, syp1 - tp1
    dice0 = (tp0 + eps) / (tp0 + delta * fn0 + (1.0 - delta) * fp0 + eps)
    dice1 = (tp1 + eps) / (tp1 + delta * fn1 + (1.0 - delta) * fp1 + eps)
    back_dice = 1.0 - dice0
    fore_dice = jnp.power(1.0 - dice1, 1.0 - gamma)   # == (1-d)*pow(1-d,-gamma), NaN-safe
    ftl = 0.5 * (jnp.mean(back_dice) + jnp.mean(fore_dice))
    fl = jnp.sum(fls) / (B * hw)
    return weight * ftl + (1.0 - weight) * fl


def _reference(y_pred, y_true, weight=WEIGHT, delta=DELTA, gamma=GAMMA, eps=EPS):
    # Pure-JAX transcription of the PyTorch module, for the correctness check.
    yp = jnp.clip(y_pred, eps, 1.0 - eps)
    tp = jnp.sum(y_true * yp, axis=(2, 3))
    fn = jnp.sum(y_true * (1.0 - yp), axis=(2, 3))
    fp = jnp.sum((1.0 - y_true) * yp, axis=(2, 3))
    dice = (tp + eps) / (tp + delta * fn + (1.0 - delta) * fp + eps)
    back_dice = 1.0 - dice[:, 0]
    fore_dice = (1.0 - dice[:, 1]) * jnp.power(1.0 - dice[:, 1], -gamma)
    ftl = jnp.mean(jnp.stack([back_dice, fore_dice], axis=-1))

    ce = -y_true * jnp.log(yp)
    back_ce = (1.0 - delta) * jnp.power(1.0 - yp[:, 0], gamma) * ce[:, 0]
    fore_ce = delta * ce[:, 1]
    fl = jnp.mean(back_ce + fore_ce)
    return weight * ftl + (1.0 - weight) * fl


if __name__ == "__main__":
    key = jax.random.PRNGKey(0)
    B, C, H, W = 2, 2, 16, 16
    k1, k2 = jax.random.split(key)

    logits = jax.random.normal(k1, (B, C, H, W), dtype=jnp.float32)
    y_pred = jax.nn.softmax(logits, axis=1)                          # probabilities, NCHW
    labels = jax.random.randint(k2, (B, H, W), 0, C)
    # One-hot targets in bf16: exact for {0,1}, halves y_true HBM traffic.
    y_true = jax.nn.one_hot(labels, C, axis=1, dtype=jnp.bfloat16)

    loss_fn = jax.jit(asymmetric_unified_focal_loss)
    loss = loss_fn(y_pred, y_true)
    jax.block_until_ready(loss)

    ref = _reference(y_pred, y_true.astype(jnp.float32))
    if not jnp.allclose(loss, ref, rtol=1e-5, atol=1e-5):
        raise SystemExit(f"mismatch: kernel={float(loss)} ref={float(ref)}")

    print("KERNEL_OK")
</pallas_src>

<mosaic_0001>
module attributes {stable_mosaic.version = 11 : i64} {
  func.func @_aufl_kernel(%arg0: i32, %arg1: i32, %arg2: memref<8x32xf32, #tpu.memory_space<vmem>>, %arg3: memref<8x32xf32, #tpu.memory_space<vmem>>, %arg4: memref<8x32xbf16, #tpu.memory_space<vmem>>, %arg5: memref<8x32xbf16, #tpu.memory_space<vmem>>, %arg6: memref<1x7x8x32xf32, #tpu.memory_space<vmem>>) attributes {dimension_semantics = [#tpu.dimension_semantics<parallel>, #tpu.dimension_semantics<arbitrary>], iteration_bounds = array<i64: 2, 1>, scalar_prefetch = 0 : i64, scratch_operands = 0 : i64, tpu.core_type = #tpu.core_type<tc>, window_params = [{transform_indices = @transform_0, window_bounds = array<i64: 8, 32>}, {transform_indices = @transform_1, window_bounds = array<i64: 8, 32>}, {transform_indices = @transform_2, window_bounds = array<i64: 8, 32>}, {transform_indices = @transform_3, window_bounds = array<i64: 8, 32>}, {transform_indices = @transform_4, window_bounds = array<i64: 1, 7, 8, 32>}]} {
    %c0_i32 = arith.constant 0 : i32
    %0 = arith.cmpi eq, %arg1, %c0_i32 : i32
    %1 = arith.extui %0 : i1 to i32
    %c0_i32_0 = arith.constant 0 : i32
    %2 = arith.cmpi ne, %1, %c0_i32_0 : i32
    scf.if %2 {
      %cst_66 = arith.constant 0.000000e+00 : f32
      %79 = vector.broadcast %cst_66 : f32 to vector<1x7x8x32xf32>
      %c0_67 = arith.constant 0 : index
      %c0_68 = arith.constant 0 : index
      %c0_69 = arith.constant 0 : index
      %c0_70 = arith.constant 0 : index
      %80 = vector.load %arg6[%c0_67, %c0_68, %c0_69, %c0_70] : memref<1x7x8x32xf32, #tpu.memory_space<vmem>>, vector<1x7x8x32xf32>
      tpu.vector_store %arg6[%c0_67, %c0_68, %c0_69, %c0_70], %79 {strides = array<i32>} : memref<1x7x8x32xf32, #tpu.memory_space<vmem>>, vector<1x7x8x32xf32>,
    } else {
    }
    %c0 = arith.constant 0 : index
    %c0_1 = arith.constant 0 : index
    %c0_2 = arith.constant 0 : index
    %c0_3 = arith.constant 0 : index
    %3 = vector.load %arg6[%c0, %c0_1, %c0_2, %c0_3] : memref<1x7x8x32xf32, #tpu.memory_space<vmem>>, vector<1x1x8x32xf32>
    %4 = vector.shape_cast %3 : vector<1x1x8x32xf32> to vector<8x32xf32>
    %c0_4 = arith.constant 0 : index
    %c1 = arith.constant 1 : index
    %c0_5 = arith.constant 0 : index
    %c0_6 = arith.constant 0 : index
    %5 = vector.load %arg6[%c0_4, %c1, %c0_5, %c0_6] : memref<1x7x8x32xf32, #tpu.memory_space<vmem>>, vector<1x1x8x32xf32>
    %6 = vector.shape_cast %5 : vector<1x1x8x32xf32> to vector<8x32xf32>
    %c0_7 = arith.constant 0 : index
    %c2 = arith.constant 2 : index
    %c0_8 = arith.constant 0 : index
    %c0_9 = arith.constant 0 : index
    %7 = vector.load %arg6[%c0_7, %c2, %c0_8, %c0_9] : memref<1x7x8x32xf32, #tpu.memory_space<vmem>>, vector<1x1x8x32xf32>
    %8 = vector.shape_cast %7 : vector<1x1x8x32xf32> to vector<8x32xf32>
    %c0_10 = arith.constant 0 : index
    %c3 = arith.constant 3 : index
    %c0_11 = arith.constant 0 : index
    %c0_12 = arith.constant 0 : index
    %9 = vector.load %arg6[%c0_10, %c3, %c0_11, %c0_12] : memref<1x7x8x32xf32, #tpu.memory_space<vmem>>, vector<1x1x8x32xf32>
    %10 = vector.shape_cast %9 : vector<1x1x8x32xf32> to vector<8x32xf32>
    %c0_13 = arith.constant 0 : index
    %c4 = arith.constant 4 : index
    %c0_14 = arith.constant 0 : index
    %c0_15 = arith.constant 0 : index
    %11 = vector.load %arg6[%c0_13, %c4, %c0_14, %c0_15] : memref<1x7x8x32xf32, #tpu.memory_space<vmem>>, vector<1x1x8x32xf32>
    %12 = vector.shape_cast %11 : vector<1x1x8x32xf32> to vector<8x32xf32>
    %c0_16 = arith.constant 0 : index
    %c5 = arith.constant 5 : index
    %c0_17 = arith.constant 0 : index
    %c0_18 = arith.constant 0 : index
    %13 = vector.load %arg6[%c0_16, %c5, %c0_17, %c0_18] : memref<1x7x8x32xf32, #tpu.memory_space<vmem>>, vector<1x1x8x32xf32>
    %14 = vector.shape_cast %13 : vector<1x1x8x32xf32> to vector<8x32xf32>
    %c0_19 = arith.constant 0 : index
    %c6 = arith.constant 6 : index
    %c0_20 = arith.constant 0 : index
    %c0_21 = arith.constant 0 : index
    %15 = vector.load %arg6[%c0_19, %c6, %c0_20, %c0_21] : memref<1x7x8x32xf32, #tpu.memory_space<vmem>>, vector<1x1x8x32xf32>
    %16 = vector.shape_cast %15 : vector<1x1x8x32xf32> to vector<8x32xf32>
    %c0_22 = arith.constant 0 : index
    %c0_23 = arith.constant 0 : index
    %17 = vector.load %arg2[%c0_22, %c0_23] : memref<8x32xf32, #tpu.memory_space<vmem>>, vector<8x32xf32>
    %c0_24 = arith.constant 0 : index
    %c0_25 = arith.constant 0 : index
    %18 = vector.load %arg3[%c0_24, %c0_25] : memref<8x32xf32, #tpu.memory_space<vmem>>, vector<8x32xf32>
    %c0_26 = arith.constant 0 : index
    %c0_27 = arith.constant 0 : index
    %19 = vector.load %arg4[%c0_26, %c0_27] : memref<8x32xbf16, #tpu.memory_space<vmem>>, vector<8x32xbf16>
    %20 = arith.extf %19 : vector<8x32xbf16> to vector<8x32xf32>
    %c0_28 = arith.constant 0 : index
    %c0_29 = arith.constant 0 : index
    %21 = vector.load %arg5[%c0_28, %c0_29] : memref<8x32xbf16, #tpu.memory_space<vmem>>, vector<8x32xbf16>
    %22 = arith.extf %21 : vector<8x32xbf16> to vector<8x32xf32>
    %cst = arith.constant 1.000000e-07 : f32
    %cst_30 = arith.constant 0.99999988 : f32
    %23 = vector.broadcast %cst : f32 to vector<8x32xf32>
    %24 = arith.maximumf %23, %17 : vector<8x32xf32>
    %25 = vector.broadcast %cst_30 : f32 to vector<8x32xf32>
    %26 = arith.minimumf %25, %24 : vector<8x32xf32>
    %cst_31 = arith.constant 1.000000e-07 : f32
    %cst_32 = arith.constant 0.99999988 : f32
    %27 = vector.broadcast %cst_31 : f32 to vector<8x32xf32>
    %28 = arith.maximumf %27, %18 : vector<8x32xf32>
    %29 = vector.broadcast %cst_32 : f32 to vector<8x32xf32>
    %30 = arith.minimumf %29, %28 : vector<8x32xf32>
    %31 = arith.mulf %20, %26 : vector<8x32xf32>
    %32 = arith.mulf %22, %30 : vector<8x32xf32>
    %cst_33 = arith.constant 1.000000e+00 : f32
    %33 = vector.broadcast %cst_33 : f32 to vector<8x32xf32>
    %34 = arith.subf %33, %26 : vector<8x32xf32>
    %35 = math.log %34 : vector<8x32xf32>
    %cst_34 = arith.constant 2.000000e-01 : f32
    %36 = vector.broadcast %cst_34 : f32 to vector<8x32xf32>
    %37 = arith.mulf %36, %35 : vector<8x32xf32>
    %38 = math.exp %37 : vector<8x32xf32>
    %39 = math.log %26 : vector<8x32xf32>
    %40 = arith.mulf %20, %39 : vector<8x32xf32>
    %41 = math.log %30 : vector<8x32xf32>
    %42 = arith.mulf %22, %41 : vector<8x32xf32>
    %43 = arith.mulf %38, %40 : vector<8x32xf32>
    %cst_35 = arith.constant 4.000000e-01 : f32
    %44 = vector.broadcast %cst_35 : f32 to vector<8x32xf32>
    %45 = arith.mulf %44, %43 : vector<8x32xf32>
    %cst_36 = arith.constant 6.000000e-01 : f32
    %46 = vector.broadcast %cst_36 : f32 to vector<8x32xf32>
    %47 = arith.mulf %46, %42 : vector<8x32xf32>
    %48 = arith.addf %45, %47 : vector<8x32xf32>
    %cst_37 = arith.constant 0.000000e+00 : f32
    %49 = vector.broadcast %cst_37 : f32 to vector<8x32xf32>
    %50 = arith.subf %49, %48 : vector<8x32xf32>
    %51 = arith.addf %4, %31 : vector<8x32xf32>
    %52 = arith.addf %6, %20 : vector<8x32xf32>
    %53 = arith.addf %8, %26 : vector<8x32xf32>
    %54 = arith.addf %10, %32 : vector<8x32xf32>
    %55 = arith.addf %12, %22 : vector<8x32xf32>
    %56 = arith.addf %14, %30 : vector<8x32xf32>
    %57 = arith.addf %16, %50 : vector<8x32xf32>
    %c0_38 = arith.constant 0 : index
    %c0_39 = arith.constant 0 : index
    %c0_40 = arith.constant 0 : index
    %c0_41 = arith.constant 0 : index
    %58 = vector.load %arg6[%c0_38, %c0_39, %c0_40, %c0_41] : memref<1x7x8x32xf32, #tpu.memory_space<vmem>>, vector<1x1x8x32xf32>
    %59 = vector.shape_cast %58 : vector<1x1x8x32xf32> to vector<8x32xf32>
    %60 = vector.shape_cast %51 : vector<8x32xf32> to vector<1x1x8x32xf32>
    tpu.vector_store %arg6[%c0_38, %c0_39, %c0_40, %c0_41], %60 {strides = array<i32>} : memref<1x7x8x32xf32, #tpu.memory_space<vmem>>, vector<1x1x8x32xf32>,
    %c0_42 = arith.constant 0 : index
    %c1_43 = arith.constant 1 : index
    %c0_44 = arith.constant 0 : index
    %c0_45 = arith.constant 0 : index
    %61 = vector.load %arg6[%c0_42, %c1_43, %c0_44, %c0_45] : memref<1x7x8x32xf32, #tpu.memory_space<vmem>>, vector<1x1x8x32xf32>
    %62 = vector.shape_cast %61 : vector<1x1x8x32xf32> to vector<8x32xf32>
    %63 = vector.shape_cast %52 : vector<8x32xf32> to vector<1x1x8x32xf32>
    tpu.vector_store %arg6[%c0_42, %c1_43, %c0_44, %c0_45], %63 {strides = array<i32>} : memref<1x7x8x32xf32, #tpu.memory_space<vmem>>, vector<1x1x8x32xf32>,
    %c0_46 = arith.constant 0 : index
    %c2_47 = arith.constant 2 : index
    %c0_48 = arith.constant 0 : index
    %c0_49 = arith.constant 0 : index
    %64 = vector.load %arg6[%c0_46, %c2_47, %c0_48, %c0_49] : memref<1x7x8x32xf32, #tpu.memory_space<vmem>>, vector<1x1x8x32xf32>
    %65 = vector.shape_cast %64 : vector<1x1x8x32xf32> to vector<8x32xf32>
    %66 = vector.shape_cast %53 : vector<8x32xf32> to vector<1x1x8x32xf32>
    tpu.vector_store %arg6[%c0_46, %c2_47, %c0_48, %c0_49], %66 {strides = array<i32>} : memref<1x7x8x32xf32, #tpu.memory_space<vmem>>, vector<1x1x8x32xf32>,
    %c0_50 = arith.constant 0 : index
    %c3_51 = arith.constant 3 : index
    %c0_52 = arith.constant 0 : index
    %c0_53 = arith.constant 0 : index
    %67 = vector.load %arg6[%c0_50, %c3_51, %c0_52, %c0_53] : memref<1x7x8x32xf32, #tpu.memory_space<vmem>>, vector<1x1x8x32xf32>
    %68 = vector.shape_cast %67 : vector<1x1x8x32xf32> to vector<8x32xf32>
    %69 = vector.shape_cast %54 : vector<8x32xf32> to vector<1x1x8x32xf32>
    tpu.vector_store %arg6[%c0_50, %c3_51, %c0_52, %c0_53], %69 {strides = array<i32>} : memref<1x7x8x32xf32, #tpu.memory_space<vmem>>, vector<1x1x8x32xf32>,
    %c0_54 = arith.constant 0 : index
    %c4_55 = arith.constant 4 : index
    %c0_56 = arith.constant 0 : index
    %c0_57 = arith.constant 0 : index
    %70 = vector.load %arg6[%c0_54, %c4_55, %c0_56, %c0_57] : memref<1x7x8x32xf32, #tpu.memory_space<vmem>>, vector<1x1x8x32xf32>
    %71 = vector.shape_cast %70 : vector<1x1x8x32xf32> to vector<8x32xf32>
    %72 = vector.shape_cast %55 : vector<8x32xf32> to vector<1x1x8x32xf32>
    tpu.vector_store %arg6[%c0_54, %c4_55, %c0_56, %c0_57], %72 {strides = array<i32>} : memref<1x7x8x32xf32, #tpu.memory_space<vmem>>, vector<1x1x8x32xf32>,
    %c0_58 = arith.constant 0 : index
    %c5_59 = arith.constant 5 : index
    %c0_60 = arith.constant 0 : index
    %c0_61 = arith.constant 0 : index
    %73 = vector.load %arg6[%c0_58, %c5_59, %c0_60, %c0_61] : memref<1x7x8x32xf32, #tpu.memory_space<vmem>>, vector<1x1x8x32xf32>
    %74 = vector.shape_cast %73 : vector<1x1x8x32xf32> to vector<8x32xf32>
    %75 = vector.shape_cast %56 : vector<8x32xf32> to vector<1x1x8x32xf32>
    tpu.vector_store %arg6[%c0_58, %c5_59, %c0_60, %c0_61], %75 {strides = array<i32>} : memref<1x7x8x32xf32, #tpu.memory_space<vmem>>, vector<1x1x8x32xf32>,
    %c0_62 = arith.constant 0 : index
    %c6_63 = arith.constant 6 : index
    %c0_64 = arith.constant 0 : index
    %c0_65 = arith.constant 0 : index
    %76 = vector.load %arg6[%c0_62, %c6_63, %c0_64, %c0_65] : memref<1x7x8x32xf32, #tpu.memory_space<vmem>>, vector<1x1x8x32xf32>
    %77 = vector.shape_cast %76 : vector<1x1x8x32xf32> to vector<8x32xf32>
    %78 = vector.shape_cast %57 : vector<8x32xf32> to vector<1x1x8x32xf32>
    tpu.vector_store %arg6[%c0_62, %c6_63, %c0_64, %c0_65], %78 {strides = array<i32>} : memref<1x7x8x32xf32, #tpu.memory_space<vmem>>, vector<1x1x8x32xf32>,
    return
  }
  func.func @transform_0(%arg0: i32, %arg1: i32) -> (i32, i32) {
    %c2_i32 = arith.constant 2 : i32
    %0 = arith.muli %c2_i32, %arg0 : i32
    %c0_i32 = arith.constant 0 : i32
    return %0, %arg1 : i32, i32
  }
  func.func @transform_1(%arg0: i32, %arg1: i32) -> (i32, i32) {
    %c2_i32 = arith.constant 2 : i32
    %0 = arith.muli %c2_i32, %arg0 : i32
    %c1_i32 = arith.constant 1 : i32
    %1 = arith.addi %0, %c1_i32 : i32
    %c0_i32 = arith.constant 0 : i32
    return %1, %arg1 : i32, i32
  }
  func.func @transform_2(%arg0: i32, %arg1: i32) -> (i32, i32) {
    %c2_i32 = arith.constant 2 : i32
    %0 = arith.muli %c2_i32, %arg0 : i32
    %c0_i32 = arith.constant 0 : i32
    return %0, %arg1 : i32, i32
  }
  func.func @transform_3(%arg0: i32, %arg1: i32) -> (i32, i32) {
    %c2_i32 = arith.constant 2 : i32
    %0 = arith.muli %c2_i32, %arg0 : i32
    %c1_i32 = arith.constant 1 : i32
    %1 = arith.addi %0, %c1_i32 : i32
    %c0_i32 = arith.constant 0 : i32
    return %1, %arg1 : i32, i32
  }
  func.func @transform_4(%arg0: i32, %arg1: i32) -> (i32, i32, i32, i32) {
    %c0_i32 = arith.constant 0 : i32
    %c0_i32_0 = arith.constant 0 : i32
    %c0_i32_1 = arith.constant 0 : i32
    %c0_i32_2 = arith.constant 0 : i32
    return %arg0, %c0_i32, %c0_i32_0, %c0_i32_1 : i32, i32, i32, i32
  }
}

</mosaic_0001>

<llo_original>
// kernel: asymmetric_unified_focal_loss.1
$region0: #{asymmetric_unified_focal_loss.1}
  #allocation0 [shape = 'u32[]', space=smem, size = 0x4, offset = 0x4, fixed_abs, tag = 'smem constant byte address 0x4 - core index']
  #allocation1 [shape = 'u32[144,128]{1,0:T(1,128)}', space=vmem, size = 0x12000, scoped, tag = 'internal scratch']
  %s0 = inlined_call_operand.vmem [shape: f32[32,32], index: 0, kind: input, shape index: {}, may-alias: {0,1}]
  %s1 = inlined_call_operand.vmem [shape: f32[32,32], index: 1, kind: input, shape index: {}, may-alias: {0,1}]
  %s2 = inlined_call_operand.vmem [shape: bf16[32,32], index: 2, kind: input, shape index: {}, may-alias: {2,3}]
  %s3 = inlined_call_operand.vmem [shape: bf16[32,32], index: 3, kind: input, shape index: {}, may-alias: {2,3}]
  %s4 = inlined_call_operand.vmem [shape: f32[2,7,8,32], index: 4, kind: output, shape index: {}]
  %s5 = sld [smem:[#allocation0]]
  $region53: #{asymmetric_unified_focal_loss.1} parent=0
    _
  %s7 = ssub.s32 1, %s5
  %s8 = scalar_select 0, %s7, %s5
  loop: start=0, step=1, limit=4
  $region2: #{asymmetric_unified_focal_loss.1} parent=0 // loop_pre_header
    _
  $region3: #{asymmetric_unified_focal_loss.1} parent=0 // loop_header
    %s10 = sphi 0, %s14
    %p11 = scmp.ge.s32.totalorder %s10, 4
    %s17 = sphi 0, %s29
    %s18 = sphi 0, %s25
    %s19 = sphi 0, %s17
    %s20 = sphi 0, %s18
    %s21 = sphi 0, %s19
    %s22 = sphi 0, %s20
    %s36 = sphi 0, %s38
    %s39 = sphi 0, %s36
    %s40 = sphi 0, %s39
    %s56 = sphi 0, %s40
    %s68 = sphi 0, %s70
    %s71 = sphi 0, %s68
    %s72 = sphi 0, %s71
    %s88 = sphi 0, %s72
    %s98 = sphi 0, %s100
    %s101 = sphi 0, %s98
    %s102 = sphi 0, %s101
    %s118 = sphi 0, %s102
    %s130 = sphi 0, %s132
    %s133 = sphi 0, %s130
    %s134 = sphi 0, %s133
    %s150 = sphi 0, %s134
    %s156 = sphi 0, %s158
    %s159 = sphi 0, %s156
    %s160 = sphi 0, %s159
    %s176 = sphi 0, %s160
  $region4: #{asymmetric_unified_focal_loss.1} parent=0 // loop_header_branch
    %13 = sbr.rel (%p11) target = $region8
  $region5: #{asymmetric_unified_focal_loss.1} parent=0 // loop_body
    %s15 = ssub.s32 %s10, 1
    %s16 = ssub.s32 %s10, 2
    %s23 = sadd.s32 1, %s18
    %p24 = scmp.ge.s32.totalorder %s23, 1
    %s25 = scalar_select %p24, 0, %s23
    %s26 = sadd.s32 1, %s17
    %s27 = scalar_select %p24, %s26, %s17
    %p28 = scmp.ge.s32.totalorder %s27, 2
    %s29 = scalar_select %p28, 0, %s27
    %s30 = smul.u32 %s17, 2
    %s31 = smul.u32 %s29, 2
    %s32 = ssub.s32 %s30, %s31
    %s33 = ssub.s32 %s18, %s25
    %s34 = sor.u32 %s32, %s33
    %p35 = scmp.eq.s32.totalorder %s34, 0
    %s37 = sadd.s32 %s36, 1
    %s38 = scalar_select %p35, %s36, %s37
    %p41 = pneg %p35
    %p42 = scmp.eq.s32.totalorder %s10, 1
    %p43 = por %p41, %p42
    %p44 = scmp.ne.s32.totalorder %s36, %s39
    %p45 = scmp.eq.s32.totalorder %s10, 0
    %p46 = por %p44, %p45
    %p47 = scmp.ne.s32.totalorder %s36, %s39
    %p48 = scmp.eq.s32.totalorder %s15, 1
    %p49 = por %p47, %p48
    %p50 = scmp.ne.s32.totalorder %s39, %s40
    %p51 = scmp.eq.s32.totalorder %s15, 0
    %p52 = por %p50, %p51
    %p53 = scmp.ne.s32.totalorder %s39, %s40
    %p54 = scmp.eq.s32.totalorder %s16, 1
    %p55 = por %p53, %p54
    %p57 = scmp.ne.s32.totalorder %s40, %s56
    %p58 = scmp.eq.s32.totalorder %s16, 0
    %p59 = por %p57, %p58
    %s60 = smul.u32 %s17, 2
    %s61 = sadd.s32 %s60, 1
    %s62 = smul.u32 %s29, 2
    %s63 = sadd.s32 %s62, 1
    %s64 = ssub.s32 %s61, %s63
    %s65 = ssub.s32 %s18, %s25
    %s66 = sor.u32 %s64, %s65
    %p67 = scmp.eq.s32.totalorder %s66, 0
    %s69 = sadd.s32 %s68, 1
    %s70 = scalar_select %p67, %s68, %s69
    %p73 = pneg %p67
    %p74 = scmp.eq.s32.totalorder %s10, 1
    %p75 = por %p73, %p74
    %p76 = scmp.ne.s32.totalorder %s68, %s71
    %p77 = scmp.eq.s32.totalorder %s10, 0
    %p78 = por %p76, %p77
    %p79 = scmp.ne.s32.totalorder %s68, %s71
    %p80 = scmp.eq.s32.totalorder %s15, 1
    %p81 = por %p79, %p80
    %p82 = scmp.ne.s32.totalorder %s71, %s72
    %p83 = scmp.eq.s32.totalorder %s15, 0
    %p84 = por %p82, %p83
    %p85 = scmp.ne.s32.totalorder %s71, %s72
    %p86 = scmp.eq.s32.totalorder %s16, 1
    %p87 = por %p85, %p86
    %p89 = scmp.ne.s32.totalorder %s72, %s88
    %p90 = scmp.eq.s32.totalorder %s16, 0
    %p91 = por %p89, %p90
    %s92 = smul.u32 %s17, 2
    %s93 = smul.u32 %s29, 2
    %s94 = ssub.s32 %s92, %s93
    %s95 = ssub.s32 %s18, %s25
    %s96 = sor.u32 %s94, %s95
    %p97 = scmp.eq.s32.totalorder %s96, 0
    %s99 = sadd.s32 %s98, 1
    %s100 = scalar_select %p97, %s98, %s99
    %p103 = pneg %p97
    %p104 = scmp.eq.s32.totalorder %s10, 1
    %p105 = por %p103, %p104
    %p106 = scmp.ne.s32.totalorder %s98, %s101
    %p107 = scmp.eq.s32.totalorder %s10, 0
    %p108 = por %p106, %p107
    %p109 = scmp.ne.s32.totalorder %s98, %s101
    %p110 = scmp.eq.s32.totalorder %s15, 1
    %p111 = por %p109, %p110
    %p112 = scmp.ne.s32.totalorder %s101, %s102
    %p113 = scmp.eq.s32.totalorder %s15, 0
    %p114 = por %p112, %p113
    %p115 = scmp.ne.s32.totalorder %s101, %s102
    %p116 = scmp.eq.s32.totalorder %s16, 1
    %p117 = por %p115, %p116
    %p119 = scmp.ne.s32.totalorder %s102, %s118
    %p120 = scmp.eq.s32.totalorder %s16, 0
    %p121 = por %p119, %p120
    %s122 = smul.u32 %s17, 2
    %s123 = sadd.s32 %s122, 1
    %s124 = smul.u32 %s29, 2
    %s125 = sadd.s32 %s124, 1
    %s126 = ssub.s32 %s123, %s125
    %s127 = ssub.s32 %s18, %s25
    %s128 = sor.u32 %s126, %s127
    %p129 = scmp.eq.s32.totalorder %s128, 0
    %s131 = sadd.s32 %s130, 1
    %s132 = scalar_select %p129, %s130, %s131
    %p135 = pneg %p129
    %p136 = scmp.eq.s32.totalorder %s10, 1
    %p137 = por %p135, %p136
    %p138 = scmp.ne.s32.totalorder %s130, %s133
    %p139 = scmp.eq.s32.totalorder %s10, 0
    %p140 = por %p138, %p139
    %p141 = scmp.ne.s32.totalorder %s130, %s133
    %p142 = scmp.eq.s32.totalorder %s15, 1
    %p143 = por %p141, %p142
    %p144 = scmp.ne.s32.totalorder %s133, %s134
    %p145 = scmp.eq.s32.totalorder %s15, 0
    %p146 = por %p144, %p145
    %p147 = scmp.ne.s32.totalorder %s133, %s134
    %p148 = scmp.eq.s32.totalorder %s16, 1
    %p149 = por %p147, %p148
    %p151 = scmp.ne.s32.totalorder %s134, %s150
    %p152 = scmp.eq.s32.totalorder %s16, 0
    %p153 = por %p151, %p152
    %s154 = ssub.s32 %s17, %s29
    %p155 = scmp.eq.s32.totalorder %s154, 0
    %s157 = sadd.s32 %s156, 1
    %s158 = scalar_select %p155, %s156, %s157
    %p161 = pneg %p155
    %p162 = scmp.eq.s32.totalorder %s10, 1
    %p163 = por %p161, %p162
    %p164 = scmp.ne.s32.totalorder %s156, %s159
    %p165 = scmp.eq.s32.totalorder %s10, 0
    %p166 = por %p164, %p165
    %p167 = scmp.ne.s32.totalorder %s156, %s159
    %p168 = scmp.eq.s32.totalorder %s15, 1
    %p169 = por %p167, %p168
    %p170 = scmp.ne.s32.totalorder %s159, %s160
    %p171 = scmp.eq.s32.totalorder %s15, 0
    %p172 = por %p170, %p171
    %p173 = scmp.ne.s32.totalorder %s159, %s160
    %p174 = scmp.eq.s32.totalorder %s16, 1
    %p175 = por %p173, %p174
    %p177 = scmp.ne.s32.totalorder %s160, %s176
    %p178 = scmp.eq.s32.totalorder %s16, 0
    %p179 = por %p177, %p178
    %p180 = scmp.le.s32.totalorder 1, %s10
    %p181 = scmp.lt.s32.totalorder %s10, 3
    %p182 = pnand %p180, %p181
    %p183 = pneg %p182
    // Predicated region
    $region9: #{asymmetric_unified_focal_loss.1} parent=5 // pred_check
      _
    $region10: #{asymmetric_unified_focal_loss.1} parent=5 // pred_check_branch
      %185 = sbr.rel (%p182) target = $region12
    $region11: #{asymmetric_unified_focal_loss.1} parent=5 // pred_region
      %s186 = ssub.s32 %s10, 1
    $region12: #{asymmetric_unified_focal_loss.1} parent=5 // pred_fallthru
      _
    %p187 = scmp.lt.s32.totalorder %s10, 2
    // Predicated region
    $region13: #{asymmetric_unified_focal_loss.1} parent=5 // pred_check
      %p188 = pneg %p187
    $region14: #{asymmetric_unified_focal_loss.1} parent=5 // pred_check_branch
      %190 = sbr.rel (%p188) target = $region16
    $region15: #{asymmetric_unified_focal_loss.1} parent=5 // pred_region
      // Predicated region
      $region17: #{asymmetric_unified_focal_loss.1} parent=15 // pred_check
        %p191 = pneg %p46
      $region18: #{asymmetric_unified_focal_loss.1} parent=15 // pred_check_branch
        %193 = sbr.rel (%p191) target = $region20
      $region19: #{asymmetric_unified_focal_loss.1} parent=15 // pred_region
        %s194 = smul.u32 %s17, 2
        %p195 = scmp.lt.s32.totalorder %s194, 3
        %s196 = scalar_select %p195, %s194, 3
        %p197 = scmp.lt.s32.totalorder %s18, 0
        %s198 = scalar_select %p197, %s18, 0
        %s199 = sadd.s32 %s198, %s196
        %s200 = smul.addr %s199, 8
        %s201 = scalar_lea.vmem %s0, %s200
        %s202 = smul.u32 %s17, 2
      $region20: #{asymmetric_unified_focal_loss.1} parent=15 // pred_fallthru
        _
      // Predicated region
      $region21: #{asymmetric_unified_focal_loss.1} parent=15 // pred_check
        %p203 = pneg %p78
      $region22: #{asymmetric_unified_focal_loss.1} parent=15 // pred_check_branch
        %205 = sbr.rel (%p203) target = $region24
      $region23: #{asymmetric_unified_focal_loss.1} parent=15 // pred_region
        %s206 = smul.u32 %s17, 2
        %s207 = sadd.s32 %s206, 1
        %p208 = scmp.lt.s32.totalorder %s207, 3
        %s209 = scalar_select %p208, %s207, 3
        %p210 = scmp.lt.s32.totalorder %s18, 0
        %s211 = scalar_select %p210, %s18, 0
        %s212 = sadd.s32 %s211, %s209
        %s213 = smul.addr %s212, 8
        %s214 = scalar_lea.vmem %s1, %s213
        %s215 = smul.u32 %s17, 2
        %s216 = sadd.s32 %s215, 1
      $region24: #{asymmetric_unified_focal_loss.1} parent=15 // pred_fallthru
        _
      // Predicated region
      $region25: #{asymmetric_unified_focal_loss.1} parent=15 // pred_check
        %p217 = pneg %p108
      $region26: #{asymmetric_unified_focal_loss.1} parent=15 // pred_check_branch
        %219 = sbr.rel (%p217) target = $region28
      $region27: #{asymmetric_unified_focal_loss.1} parent=15 // pred_region
        %s220 = smul.u32 %s17, 2
        %p221 = scmp.lt.s32.totalorder %s220, 3
        %s222 = scalar_select %p221, %s220, 3
        %p223 = scmp.lt.s32.totalorder %s18, 0
        %s224 = scalar_select %p223, %s18, 0
        %s225 = sadd.s32 %s224, %s222
        %s226 = smul.addr %s225, 4
        %s227 = scalar_lea.vmem %s2, %s226
        %s228 = smul.u32 %s17, 2
      $region28: #{asymmetric_unified_focal_loss.1} parent=15 // pred_fallthru
        _
      // Predicated region
      $region29: #{asymmetric_unified_focal_loss.1} parent=15 // pred_check
        %p229 = pneg %p140
      $region30: #{asymmetric_unified_focal_loss.1} parent=15 // pred_check_branch
        %231 = sbr.rel (%p229) target = $region32
      $region31: #{asymmetric_unified_focal_loss.1} parent=15 // pred_region
        %s232 = smul.u32 %s17, 2
        %s233 = sadd.s32 %s232, 1
        %p234 = scmp.lt.s32.totalorder %s233, 3
        %s235 = scalar_select %p234, %s233, 3
        %p236 = scmp.lt.s32.totalorder %s18, 0
        %s237 = scalar_select %p236, %s18, 0
        %s238 = sadd.s32 %s237, %s235
        %s239 = smul.addr %s238, 4
        %s240 = scalar_lea.vmem %s3, %s239
        %s241 = smul.u32 %s17, 2
        %s242 = sadd.s32 %s241, 1
      $region32: #{asymmetric_unified_focal_loss.1} parent=15 // pred_fallthru
        _
    $region16: #{asymmetric_unified_focal_loss.1} parent=5 // pred_fallthru
      _
    %p243 = scmp.le.s32.totalorder 1, %s10
    %p244 = scmp.lt.s32.totalorder %s10, 3
    %p245 = pnand %p243, %p244
    %p246 = pneg %p245
    // Predicated region
    $region33: #{asymmetric_unified_focal_loss.1} parent=5 // pred_check
      _
    $region34: #{asymmetric_unified_focal_loss.1} parent=5 // pred_check_branch
      %248 = sbr.rel (%p245) target = $region36
    $region35: #{asymmetric_unified_focal_loss.1} parent=5 // pred_region
      %s249 = ssub.s32 %s10, 1
      %s250 = smul.u32 %s19, 2
      %p251 = scmp.lt.s32.totalorder %s250, 3
      %s252 = scalar_select %p251, %s250, 3
      %p253 = scmp.lt.s32.totalorder %s20, 0
      %s254 = scalar_select %p253, %s20, 0
      %s255 = sadd.s32 %s254, %s252
      %s256 = smul.addr %s255, 8
      %s257 = scalar_lea.vmem %s0, %s256
      %p258 = pneg %p52
      %p259 = pneg %p49
      %s260 = smul.u32 %s19, 2
      %s261 = sadd.s32 %s260, 1
      %p262 = scmp.lt.s32.totalorder %s261, 3
      %s263 = scalar_select %p262, %s261, 3
      %p264 = scmp.lt.s32.totalorder %s20, 0
      %s265 = scalar_select %p264, %s20, 0
      %s266 = sadd.s32 %s265, %s263
      %s267 = smul.addr %s266, 8
      %s268 = scalar_lea.vmem %s1, %s267
      %p269 = pneg %p84
      %p270 = pneg %p81
      %s271 = smul.u32 %s19, 2
      %p272 = scmp.lt.s32.totalorder %s271, 3
      %s273 = scalar_select %p272, %s271, 3
      %p274 = scmp.lt.s32.totalorder %s20, 0
      %s275 = scalar_select %p274, %s20, 0
      %s276 = sadd.s32 %s275, %s273
      %s277 = smul.addr %s276, 4
      %s278 = scalar_lea.vmem %s2, %s277
      %p279 = pneg %p114
      %p280 = pneg %p111
      %s281 = smul.u32 %s19, 2
      %s282 = sadd.s32 %s281, 1
      %p283 = scmp.lt.s32.totalorder %s282, 3
      %s284 = scalar_select %p283, %s282, 3
      %p285 = scmp.lt.s32.totalorder %s20, 0
      %s286 = scalar_select %p285, %s20, 0
      %s287 = sadd.s32 %s286, %s284
      %s288 = smul.addr %s287, 4
      %s289 = scalar_lea.vmem %s3, %s288
      %p290 = pneg %p146
      %p291 = pneg %p143
      %p292 = pneg %p172
      %p293 = pneg %p169
      %p294 = scmp.lt.s32.totalorder %s19, 1
      %s295 = scalar_select %p294, %s19, 1
      %s296 = smul.addr %s295, 7
      %s297 = smul.addr %s296, 8
      %s298 = scalar_lea.vmem %s4, %s297
      %s299 = smul.u32 %s19, 2
      %p300 = scmp.lt.s32.totalorder %s299, 3
      %s301 = scalar_select %p300, %s299, 3
      %p302 = scmp.lt.s32.totalorder %s20, 0
      %s303 = scalar_select %p302, %s20, 0
      %s304 = sadd.s32 %s303, %s301
      %s305 = smul.addr %s304, 8
      %s306 = scalar_lea.vmem %s0, %s305
      %s307 = smul.u32 %s19, 2
      %s308 = smul.u32 %s19, 2
      %s309 = sadd.s32 %s308, 1
      %p310 = scmp.lt.s32.totalorder %s309, 3
      %s311 = scalar_select %p310, %s309, 3
      %p312 = scmp.lt.s32.totalorder %s20, 0
      %s313 = scalar_select %p312, %s20, 0
      %s314 = sadd.s32 %s313, %s311
      %s315 = smul.addr %s314, 8
      %s316 = scalar_lea.vmem %s1, %s315
      %s317 = smul.u32 %s19, 2
      %s318 = sadd.s32 %s317, 1
      %s319 = smul.u32 %s19, 2
      %p320 = scmp.lt.s32.totalorder %s319, 3
      %s321 = scalar_select %p320, %s319, 3
      %p322 = scmp.lt.s32.totalorder %s20, 0
      %s323 = scalar_select %p322, %s20, 0
      %s324 = sadd.s32 %s323, %s321
      %s325 = smul.addr %s324, 4
      %s326 = scalar_lea.vmem %s2, %s325
      %s327 = smul.u32 %s19, 2
      %s328 = smul.u32 %s19, 2
      %s329 = sadd.s32 %s328, 1
      %p330 = scmp.lt.s32.totalorder %s329, 3
      %s331 = scalar_select %p330, %s329, 3
      %p332 = scmp.lt.s32.totalorder %s20, 0
      %s333 = scalar_select %p332, %s20, 0
      %s334 = sadd.s32 %s333, %s331
      %s335 = smul.addr %s334, 4
      %s336 = scalar_lea.vmem %s3, %s335
      %s337 = smul.u32 %s19, 2
      %s338 = sadd.s32 %s337, 1
      %p339 = scmp.lt.s32.totalorder %s19, 1
      %s340 = scalar_select %p339, %s19, 1
      %s341 = smul.addr %s340, 7
      %s342 = smul.addr %s341, 8
      %s343 = scalar_lea.vmem %s4, %s342
      %p344 = scmp.eq.s32.totalorder %s20, 0
      // Predicated region
      $region37: #{asymmetric_unified_focal_loss.1} parent=35 // pred_check
        %p345 = pneg %p344
      $region38: #{asymmetric_unified_focal_loss.1} parent=35 // pred_check_branch
        %347 = sbr.rel (%p345) target = $region40
      $region39: #{asymmetric_unified_focal_loss.1} parent=35 // pred_region
        %vm348 = vcmask 261120
        %349 = vst.msk [vmem:[%s343] sm:$0xff] %vm348, 0.0
        %350 = vst.msk [vmem:[%s343 + $0x8] sm:$0xff] %vm348, 0.0
        %351 = vst.msk [vmem:[%s343 + $0x10] sm:$0xff] %vm348, 0.0
        %352 = vst.msk [vmem:[%s343 + $0x18] sm:$0xff] %vm348, 0.0
        %353 = vst.msk [vmem:[%s343 + $0x20] sm:$0xff] %vm348, 0.0
        %354 = vst.msk [vmem:[%s343 + $0x28] sm:$0xff] %vm348, 0.0
        %355 = vst.msk [vmem:[%s343 + $0x30] sm:$0xff] %vm348, 0.0
      $region40: #{asymmetric_unified_focal_loss.1} parent=35 // pred_fallthru
        _
      %v356 = vld [vmem:[%s343] sm:$0xff]
      %s357 = scalar_lea.vmem %s343, 8
      %v358 = vld [vmem:[%s357] sm:$0xff]
      %s359 = scalar_lea.vmem %s343, 16
      %v360 = vld [vmem:[%s359] sm:$0xff]
      %s361 = scalar_lea.vmem %s343, 24
      %v362 = vld [vmem:[%s361] sm:$0xff]
      %s363 = scalar_lea.vmem %s343, 32
      %v364 = vld [vmem:[%s363] sm:$0xff]
      %s365 = scalar_lea.vmem %s343, 40
      %v366 = vld [vmem:[%s365] sm:$0xff]
      %s367 = scalar_lea.vmem %s343, 48
      %v368 = vld [vmem:[%s367] sm:$0xff]
      %v369 = vld [vmem:[%s306] sm:$0xff]
      %v370 = vld [vmem:[%s316] sm:$0xff]
      %v371 = vld [vmem:[%s326] sm:$0xf]
      %v372 = vunpack.c.l.bf16 %v371
      %v373 = vld [vmem:[%s336] sm:$0xf]
      %v374 = vunpack.c.l.bf16 %v373
      %v375 = vmax.f32 %v369, 1e-07
      %v376 = vmin.f32 %v375, 0.9999999
      %v377 = vmax.f32 %v370, 1e-07
      %v378 = vmin.f32 %v377, 0.9999999
      %v379 = vmul.f32 %v372, %v376
      %v380 = vmul.f32 %v374, %v378
      %v381 = vsub.f32 1.0, %v376
      %v382 = vlog2.pop %v381
      %v383 = vmul.f32 %v382, 0.6931472
      %v384 = vmul.f32 %v383, 0.2
      %v385 = vmul.f32 %v384, 1.442695
      %v386 = vpow.pop %v385
      %v387 = vlog2.pop %v376
      %v388 = vmul.f32 %v387, 0.6931472
      %v389 = vmul.f32 %v372, %v388
      %v390 = vlog2.pop %v378
      %v391 = vmul.f32 %v390, 0.6931472
      %v392 = vmul.f32 %v374, %v391
      %v393 = vmul.f32 %v386, %v389
      %v394 = vmul.f32 %v393, 0.4
      %v395 = vmul.f32 %v392, 0.6
      %v396 = vadd.f32 %v394, %v395
      %v397 = vsub.f32 0.0, %v396
      %v398 = vadd.f32 %v356, %v379
      %v399 = vadd.f32 %v358, %v372
      %v400 = vadd.f32 %v360, %v376
      %v401 = vadd.f32 %v362, %v380
      %v402 = vadd.f32 %v364, %v374
      %v403 = vadd.f32 %v366, %v378
      %v404 = vadd.f32 %v368, %v397
      %vm405 = vcmask 261120
      %406 = vst.msk [vmem:[%s343] sm:$0xff] %vm405, %v398
      %407 = vst.msk [vmem:[%s357] sm:$0xff] %vm405, %v399
      %408 = vst.msk [vmem:[%s359] sm:$0xff] %vm405, %v400
      %409 = vst.msk [vmem:[%s361] sm:$0xff] %vm405, %v401
      %410 = vst.msk [vmem:[%s363] sm:$0xff] %vm405, %v402
      %411 = vst.msk [vmem:[%s365] sm:$0xff] %vm405, %v403
      %412 = vst.msk [vmem:[%s367] sm:$0xff] %vm405, %v404
      %p413 = scmp.lt.s32.totalorder %s19, 1
      %s414 = scalar_select %p413, %s19, 1
      %s415 = smul.addr %s414, 7
      %s416 = smul.addr %s415, 8
      %s417 = scalar_lea.vmem %s4, %s416
      // Predicated region
      $region41: #{asymmetric_unified_focal_loss.1} parent=35 // pred_check
        %p418 = pneg %p169
      $region42: #{asymmetric_unified_focal_loss.1} parent=35 // pred_check_branch
        %420 = sbr.rel (%p418) target = $region44
      $region43: #{asymmetric_unified_focal_loss.1} parent=35 // pred_region
        _
      $region44: #{asymmetric_unified_focal_loss.1} parent=35 // pred_fallthru
        _
    $region36: #{asymmetric_unified_focal_loss.1} parent=5 // pred_fallthru
      _
    %p421 = scmp.le.s32.totalorder 2, %s10
    // Predicated region
    $region45: #{asymmetric_unified_focal_loss.1} parent=5 // pred_check
      %p422 = pneg %p421
    $region46: #{asymmetric_unified_focal_loss.1} parent=5 // pred_check_branch
      %424 = sbr.rel (%p422) target = $region48
    $region47: #{asymmetric_unified_focal_loss.1} parent=5 // pred_region
      %s425 = ssub.s32 %s10, 2
      // Predicated region
      $region49: #{asymmetric_unified_focal_loss.1} parent=47 // pred_check
        %p426 = pneg %p175
      $region50: #{asymmetric_unified_focal_loss.1} parent=47 // pred_check_branch
        %428 = sbr.rel (%p426) target = $region52
      $region51: #{asymmetric_unified_focal_loss.1} parent=47 // pred_region
        %p429 = scmp.lt.s32.totalorder %s21, 1
        %s430 = scalar_select %p429, %s21, 1
        %s431 = smul.addr %s430, 7
        %s432 = smul.addr %s431, 8
        %s433 = scalar_lea.vmem %s4, %s432
      $region52: #{asymmetric_unified_focal_loss.1} parent=47 // pred_fallthru
        _
    $region48: #{asymmetric_unified_focal_loss.1} parent=5 // pred_fallthru
      _
  $region6: #{asymmetric_unified_focal_loss.1} parent=0 // loop_footer
    %s14 = sadd.s32 1, %s10
  $region7: #{asymmetric_unified_focal_loss.1} parent=0 // loop_footer_branch
    %9 = sbr.rel target = $region3
  $region8: #{asymmetric_unified_focal_loss.1} parent=0 // loop_exit
    _

</llo_original>
